<compile_context>
chip_gen: v7x
topology: tpu7x:2x2x1
jax: 0.10.0
libtpu: 0.0.40
codegen_flags: <defaults>
</compile_context>

<pallas_src>
import functools

import jax
import jax.numpy as jnp
from jax.experimental import pallas as pl
from jax.experimental.pallas import tpu as pltpu


def _round_up(x, m):
    return ((x + m - 1) // m) * m


def bert_output_kernel(x_ref, w_ref, params_ref, res_ref, o_ref, *, h_valid, h_padded):
    # x_ref:      [TM, Ip]  flattened hidden_states tile (matmul dtype)
    # w_ref:      [Ip, Hp]  dense weight, pre-transposed to [in, out] (resident, single-buffered)
    # params_ref: [3,  Hp]  row 0 = dense bias, row 1 = LN gamma, row 2 = LN beta (resident)
    # res_ref:    [TM, Hp]  residual (input_tensor) tile
    # o_ref:      [TM, Hp]
    x = x_ref[...]
    w = w_ref[...]

    # Dense: x @ W  (weight already transposed in HBM) — MXU matmul, f32 accumulation.
    h = jnp.dot(x, w, preferred_element_type=jnp.float32)

    params = params_ref[...].astype(jnp.float32)      # [3, Hp]
    h = h + params[0:1, :]                            # + bias

    # Dropout: identity at inference time.
    # TODO(synk): training-mode dropout (Bernoulli mask via pltpu.prng_random_bits) not implemented.

    # Residual add.
    h = h + res_ref[...].astype(jnp.float32)

    # LayerNorm over the true hidden dim (eps = 1e-12, biased variance, matches torch.nn.LayerNorm).
    # Padded columns of h are exactly zero by construction (zero weight cols, zero bias,
    # zero residual), so the mean needs no mask; only `centered` must be masked.
    inv_h = 1.0 / float(h_valid)
    mean = jnp.sum(h, axis=-1, keepdims=True) * inv_h
    centered = h - mean
    if h_valid != h_padded:
        col = jax.lax.broadcasted_iota(jnp.int32, h.shape, 1)
        centered = jnp.where(col < h_valid, centered, 0.0)
    var = jnp.sum(centered * centered, axis=-1, keepdims=True) * inv_h
    inv = jax.lax.rsqrt(var + 1e-12)

    o_ref[...] = (centered * inv * params[1:2, :] + params[2:3, :]).astype(o_ref.dtype)


def bert_output(hidden_states, input_tensor, w, b, gamma, beta, *, tm=None,
                use_bf16_matmul=False):
    """hidden_states: [B, S, I]; input_tensor: [B, S, H]; w: [H, I] (torch Linear layout);
    b, gamma, beta: [H]. Returns [B, S, H]."""
    B, S, I = hidden_states.shape
    H = input_tensor.shape[-1]
    M = B * S

    dtype = hidden_states.dtype
    itemsize = jnp.dtype(dtype).itemsize
    out_dtype = input_tensor.dtype

    # Lane-dense padding targets for the contraction / output dims.
    Ip = _round_up(I, 128)
    Hp = _round_up(H, 128)

    # Sublane minimum depends on packing (f32: 8, bf16: 16, int8/fp8: 32).
    sub = {4: 8, 2: 16, 1: 32}.get(itemsize, 8)

    # Row tile: dtype-aware default, and keep >= 2 grid steps when possible so the
    # 'parallel' M axis can be sharded across both TensorCores on v7x.
    if tm is None:
        tm = 512 if itemsize <= 2 else 256
    TM = min(tm, max(sub, _round_up(pl.cdiv(M, 2), sub)))
    Mp = _round_up(M, TM)
    grid_m = Mp // TM

    # --- host-side layout prep (skip pads entirely when already aligned) ---
    x2 = hidden_states.reshape(M, I)
    if (Mp, Ip) != (M, I):
        x2 = jnp.pad(x2, ((0, Mp - M), (0, Ip - I)))

    r2 = input_tensor.reshape(M, H)
    if (Mp, Hp) != (M, H):
        r2 = jnp.pad(r2, ((0, Mp - M), (0, Hp - H)))

    # Pre-transpose the weight once (HBM) so the kernel never needs a per-step transpose.
    wt = w.T  # [I, H]
    if (Ip, Hp) != (I, H):
        wt = jnp.pad(wt, ((0, Ip - I), (0, Hp - H)))

    def _pad1(v):
        return jnp.pad(v, (0, Hp - H)) if Hp != H else v

    params = jnp.stack([_pad1(b), _pad1(gamma), _pad1(beta)], axis=0)  # [3, Hp]

    if use_bf16_matmul and dtype == jnp.float32:
        # Numerics note: matmul operands become bf16; accumulation and LN stay f32.
        x2 = x2.astype(jnp.bfloat16)
        wt = wt.astype(jnp.bfloat16)

    x_isz = jnp.dtype(x2.dtype).itemsize
    w_isz = jnp.dtype(wt.dtype).itemsize
    r_isz = jnp.dtype(r2.dtype).itemsize
    o_isz = jnp.dtype(out_dtype).itemsize

    # Explicit scoped-VMEM budget: resident weight (single-buffered) + double-buffered
    # activation/residual/output tiles + params + f32 epilogue headroom.
    vmem_est = (Ip * Hp * w_isz
                + 2 * TM * Ip * x_isz
                + 2 * TM * Hp * r_isz
                + 2 * TM * Hp * o_isz
                + 2 * 3 * Hp * 4
                + 4 * TM * Hp * 4)
    vmem_limit = int(min(max(2 * vmem_est, 32 * 1024 * 1024), 100 * 1024 * 1024))

    cost = pl.CostEstimate(
        flops=2 * Mp * Ip * Hp,
        transcendentals=Mp,  # one rsqrt per row
        bytes_accessed=(Mp * Ip * x_isz + Mp * Hp * r_isz + Mp * Hp * o_isz
                        + Ip * Hp * w_isz + 3 * Hp * 4),
    )

    kernel = functools.partial(bert_output_kernel, h_valid=H, h_padded=Hp)

    out = pl.pallas_call(
        kernel,
        out_shape=jax.ShapeDtypeStruct((Mp, Hp), out_dtype),
        grid_spec=pltpu.PrefetchScalarGridSpec(
            num_scalar_prefetch=0,
            grid=(grid_m,),
            in_specs=[
                # activations: tiled over M (bump to pl.Buffered(3) on v6e if DMA is exposed)
                pl.BlockSpec((TM, Ip), lambda i: (i, 0)),
                # weight: resident, single-buffered (constant index_map -> no re-DMA)
                pl.BlockSpec((Ip, Hp), lambda i: (0, 0), pipeline_mode=pl.Buffered(1)),
                # packed bias / gamma / beta: resident
                pl.BlockSpec((3, Hp), lambda i: (0, 0)),
                # residual: tiled over M
                pl.BlockSpec((TM, Hp), lambda i: (i, 0)),
            ],
            out_specs=pl.BlockSpec((TM, Hp), lambda i: (i, 0)),
        ),
        compiler_params=pltpu.CompilerParams(
            dimension_semantics=("parallel",),
            vmem_limit_bytes=vmem_limit,
        ),
        cost_estimate=cost,
    )(x2, wt, params, r2)

    if (Mp, Hp) != (M, H):
        out = out[:M, :H]
    return out.reshape(B, S, H)


if __name__ == "__main__":
    # Small config: intermediate_size=64, hidden_size=32, batch=2, seq=8
    B, S, I, H = 2, 8, 64, 32

    key = jax.random.PRNGKey(0)
    k1, k2, k3, k4 = jax.random.split(key, 4)

    hidden_states = jax.random.normal(k1, (B, S, I), dtype=jnp.float32)
    input_tensor = jax.random.normal(k2, (B, S, H), dtype=jnp.float32)

    # Deterministic parameter init (synthetic, matches nn.Linear / LayerNorm shapes)
    w = jax.random.normal(k3, (H, I), dtype=jnp.float32) * 0.05   # Linear weight [out, in]
    b = jax.random.normal(k4, (H,), dtype=jnp.float32) * 0.01     # Linear bias
    gamma = jnp.ones((H,), dtype=jnp.float32)                     # LayerNorm weight
    beta = jnp.zeros((H,), dtype=jnp.float32)                     # LayerNorm bias

    out = bert_output(hidden_states, input_tensor, w, b, gamma, beta)
    jax.block_until_ready(out)

    # Reference check (pure JAX)
    h_ref = hidden_states @ w.T + b
    h_ref = h_ref + input_tensor
    mu = h_ref.mean(-1, keepdims=True)
    var = ((h_ref - mu) ** 2).mean(-1, keepdims=True)
    ref = (h_ref - mu) / jnp.sqrt(var + 1e-12) * gamma + beta
    assert jnp.allclose(out, ref, atol=1e-4, rtol=1e-4), "mismatch vs reference"

    print("KERNEL_OK")
</pallas_src>

<mosaic_0001>
module attributes {stable_mosaic.version = 11 : i64} {
  func.func @bert_output_kernel(%arg0: i32, %arg1: memref<8x128xf32, #tpu.memory_space<vmem>>, %arg2: memref<128x128xf32, #tpu.memory_space<vmem>>, %arg3: memref<3x128xf32, #tpu.memory_space<vmem>>, %arg4: memref<8x128xf32, #tpu.memory_space<vmem>>, %arg5: memref<8x128xf32, #tpu.memory_space<vmem>>) attributes {dimension_semantics = [#tpu.dimension_semantics<parallel>], iteration_bounds = array<i64: 2>, scalar_prefetch = 0 : i64, scratch_operands = 0 : i64, tpu.core_type = #tpu.core_type<tc>, window_params = [{transform_indices = @transform_0, window_bounds = array<i64: 8, 128>}, {pipeline_mode = #tpu.pipeline_mode<synchronous>, transform_indices = @transform_1, window_bounds = array<i64: 128, 128>}, {pipeline_mode = #tpu.pipeline_mode<synchronous>, transform_indices = @transform_2, window_bounds = array<i64: 3, 128>}, {transform_indices = @transform_3, window_bounds = array<i64: 8, 128>}, {transform_indices = @transform_4, window_bounds = array<i64: 8, 128>}]} {
    %c0 = arith.constant 0 : index
    %c0_0 = arith.constant 0 : index
    %0 = vector.load %arg1[%c0, %c0_0] : memref<8x128xf32, #tpu.memory_space<vmem>>, vector<8x128xf32>
    %c0_1 = arith.constant 0 : index
    %c0_2 = arith.constant 0 : index
    %1 = vector.load %arg2[%c0_1, %c0_2] : memref<128x128xf32, #tpu.memory_space<vmem>>, vector<128x128xf32>
    %cst = arith.constant dense<0.000000e+00> : vector<8x128xf32>
    %2 = tpu.matmul %0, %1, %cst {dimension_numbers = #tpu.dot_dimension_numbers<[1], [0], [0], [1], [0, 0, 1, 1], [], []>} : vector<8x128xf32>, vector<128x128xf32>, vector<8x128xf32> -> vector<8x128xf32>
    %c0_3 = arith.constant 0 : index
    %c0_4 = arith.constant 0 : index
    %3 = vector.load %arg3[%c0_3, %c0_4] : memref<3x128xf32, #tpu.memory_space<vmem>>, vector<3x128xf32>
    %4 = vector.extract_strided_slice %3 {offsets = [0, 0], sizes = [1, 128], strides = [1, 1]} : vector<3x128xf32> to vector<1x128xf32>
    %5 = vector.broadcast %4 : vector<1x128xf32> to vector<8x128xf32>
    %6 = arith.addf %2, %5 : vector<8x128xf32>
    %c0_5 = arith.constant 0 : index
    %c0_6 = arith.constant 0 : index
    %7 = vector.load %arg4[%c0_5, %c0_6] : memref<8x128xf32, #tpu.memory_space<vmem>>, vector<8x128xf32>
    %8 = arith.addf %6, %7 : vector<8x128xf32>
    %cst_7 = arith.constant dense<0.000000e+00> : vector<8xf32>
    %9 = vector.multi_reduction <add>, %8, %cst_7 [1] : vector<8x128xf32> to vector<8xf32>
    %10 = vector.shape_cast %9 : vector<8xf32> to vector<8x1xf32>
    %cst_8 = arith.constant 3.125000e-02 : f32
    %11 = vector.broadcast %cst_8 : f32 to vector<8x1xf32>
    %12 = arith.mulf %10, %11 : vector<8x1xf32>
    %13 = vector.broadcast %12 : vector<8x1xf32> to vector<8x128xf32>
    %14 = arith.subf %8, %13 : vector<8x128xf32>
    %15 = tpu.iota {dimensions = array<i32: 1>} : vector<8x128xi32>
    %c32_i32 = arith.constant 32 : i32
    %16 = vector.broadcast %c32_i32 : i32 to vector<8x128xi32>
    %17 = arith.cmpi slt, %15, %16 : vector<8x128xi32>
    %cst_9 = arith.constant 0.000000e+00 : f32
    %18 = vector.broadcast %cst_9 : f32 to vector<8x128xf32>
    %19 = arith.select %17, %14, %18 : vector<8x128xi1>, vector<8x128xf32>
    %20 = arith.mulf %19, %19 : vector<8x128xf32>
    %cst_10 = arith.constant dense<0.000000e+00> : vector<8xf32>
    %21 = vector.multi_reduction <add>, %20, %cst_10 [1] : vector<8x128xf32> to vector<8xf32>
    %22 = vector.shape_cast %21 : vector<8xf32> to vector<8x1xf32>
    %cst_11 = arith.constant 3.125000e-02 : f32
    %23 = vector.broadcast %cst_11 : f32 to vector<8x1xf32>
    %24 = arith.mulf %22, %23 : vector<8x1xf32>
    %cst_12 = arith.constant 9.99999996E-13 : f32
    %25 = vector.broadcast %cst_12 : f32 to vector<8x1xf32>
    %26 = arith.addf %24, %25 : vector<8x1xf32>
    %27 = math.rsqrt %26 : vector<8x1xf32>
    %28 = vector.broadcast %27 : vector<8x1xf32> to vector<8x128xf32>
    %29 = arith.mulf %19, %28 : vector<8x128xf32>
    %30 = vector.extract_strided_slice %3 {offsets = [1, 0], sizes = [1, 128], strides = [1, 1]} : vector<3x128xf32> to vector<1x128xf32>
    %31 = vector.broadcast %30 : vector<1x128xf32> to vector<8x128xf32>
    %32 = arith.mulf %29, %31 : vector<8x128xf32>
    %33 = vector.extract_strided_slice %3 {offsets = [2, 0], sizes = [1, 128], strides = [1, 1]} : vector<3x128xf32> to vector<1x128xf32>
    %34 = vector.broadcast %33 : vector<1x128xf32> to vector<8x128xf32>
    %35 = arith.addf %32, %34 : vector<8x128xf32>
    %c0_13 = arith.constant 0 : index
    %c0_14 = arith.constant 0 : index
    %36 = vector.load %arg5[%c0_13, %c0_14] : memref<8x128xf32, #tpu.memory_space<vmem>>, vector<8x128xf32>
    tpu.vector_store %arg5[%c0_13, %c0_14], %35 {strides = array<i32>} : memref<8x128xf32, #tpu.memory_space<vmem>>, vector<8x128xf32>,
    return
  }
  func.func @transform_0(%arg0: i32) -> (i32, i32) {
    %c0_i32 = arith.constant 0 : i32
    %c0_i32_0 = arith.constant 0 : i32
    return %arg0, %c0_i32 : i32, i32
  }
  func.func @transform_1(%arg0: i32) -> (i32, i32) {
    %c0_i32 = arith.constant 0 : i32
    %c0_i32_0 = arith.constant 0 : i32
    %c0_i32_1 = arith.constant 0 : i32
    return %c0_i32, %c0_i32_0 : i32, i32
  }
  func.func @transform_2(%arg0: i32) -> (i32, i32) {
    %c0_i32 = arith.constant 0 : i32
    %c0_i32_0 = arith.constant 0 : i32
    %c0_i32_1 = arith.constant 0 : i32
    return %c0_i32, %c0_i32_0 : i32, i32
  }
  func.func @transform_3(%arg0: i32) -> (i32, i32) {
    %c0_i32 = arith.constant 0 : i32
    %c0_i32_0 = arith.constant 0 : i32
    return %arg0, %c0_i32 : i32, i32
  }
  func.func @transform_4(%arg0: i32) -> (i32, i32) {
    %c0_i32 = arith.constant 0 : i32
    %c0_i32_0 = arith.constant 0 : i32
    return %arg0, %c0_i32 : i32, i32
  }
}

</mosaic_0001>

<llo_original>
// kernel: tpu_custom_call.1
$region0: #{tpu_custom_call.1}
  #allocation0 [shape = 'u32[]', space=smem, size = 0x4, offset = 0x4, fixed_abs, tag = 'smem constant byte address 0x4 - core index']
  #allocation1 [shape = 'u32[144,128]{1,0:T(1,128)}', space=vmem, size = 0x12000, scoped, tag = 'internal scratch']
  %s0 = inlined_call_operand.hbm [shape: f32[16,128], index: 0, kind: input, shape index: {}]
  %s1 = inlined_call_operand.hbm [shape: f32[128,128], index: 1, kind: input, shape index: {}]
  %s2 = inlined_call_operand.vmem [shape: f32[3,128], index: 2, kind: input, shape index: {}]
  %s3 = inlined_call_operand.hbm [shape: f32[16,128], index: 3, kind: input, shape index: {}]
  %s4 = inlined_call_operand.hbm [shape: f32[16,128], index: 4, kind: output, shape index: {}]
  %s5 = sld [smem:[#allocation0]]
  $region61: #{tpu_custom_call.1} parent=0
    _
  %s7 = ssub.s32 1, %s5
  %s8 = scalar_select 0, %s7, %s5
  $region1: #{tpu_custom_call.1} parent=0
    #allocation2 [shape = 'u8[8192]{0}', space=vmem, size = 0x2000, scoped, tag = 'input window, operand 0']
    #allocation3 [shape = 's32[2]{0}', space=sflag, size = 0x8, scoped, tag = 'scoped memory for tpu_custom_call.1']
    #allocation4 [shape = 's32[2]{0}', space=sflag, size = 0x8, scoped, tag = 'scoped memory for tpu_custom_call.1']
    #allocation5 [shape = 'u8[65536]{0}', space=vmem, size = 0x10000, scoped, tag = 'input window, operand 1, single buffered']
    #allocation6 [shape = 's32[1]{0}', space=sflag, size = 0x4, scoped, tag = 'scoped memory for tpu_custom_call.1']
    #allocation7 [shape = 'u8[8192]{0}', space=vmem, size = 0x2000, scoped, tag = 'input window, operand 3']
    #allocation8 [shape = 'u8[8192]{0}', space=vmem, size = 0x2000, scoped, tag = 'output window, operand 0']
    %9 = vsyncpa [#allocation3], 0
    %s10 = scalar_lea.sflag [#allocation3], 1
    %11 = vsyncpa %s10, 0
    %12 = vsyncpa [#allocation6], 0
    %13 = vsyncpa [#allocation4], 0
    %s14 = scalar_lea.sflag [#allocation4], 1
    %15 = vsyncpa %s14, 0
    loop: start=0, step=1, limit=4
    $region2: #{tpu_custom_call.1} parent=1 // loop_pre_header
      _
    $region3: #{tpu_custom_call.1} parent=1 // loop_header
      %s17 = sphi 0, %s21
      %p18 = scmp.ge.s32.totalorder %s17, 4
      %s27 = sphi 0, %s29
      %s30 = sphi 0, %s27
      %s31 = sphi 0, %s30
      %s47 = sphi 0, %s31
      %s51 = sphi 0, %s51
      %s53 = sphi 0, %s51
      %s54 = sphi 0, %s53
      %s68 = sphi 0, %s54
      %s72 = sphi 0, %s72
      %s74 = sphi 0, %s72
      %s75 = sphi 0, %s74
      %s89 = sphi 0, %s75
      %s95 = sphi 0, %s97
      %s98 = sphi 0, %s95
      %s99 = sphi 0, %s98
      %s115 = sphi 0, %s99
      %s121 = sphi 0, %s123
      %s124 = sphi 0, %s121
      %s125 = sphi 0, %s124
      %s141 = sphi 0, %s125
    $region4: #{tpu_custom_call.1} parent=1 // loop_header_branch
      %20 = sbr.rel (%p18) target = $region8
    $region5: #{tpu_custom_call.1} parent=1 // loop_body
      %s22 = ssub.s32 %s17, 1
      %s23 = ssub.s32 %s17, 2
      %s24 = sadd.s32 %s17, 1
      %s25 = ssub.s32 %s17, %s24
      %p26 = scmp.eq.s32.totalorder %s25, 0
      %s28 = sadd.s32 %s27, 1
      %s29 = scalar_select %p26, %s27, %s28
      %p32 = pneg %p26
      %p33 = scmp.eq.s32.totalorder %s17, 1
      %p34 = por %p32, %p33
      %p35 = scmp.ne.s32.totalorder %s27, %s30
      %p36 = scmp.eq.s32.totalorder %s17, 0
      %p37 = por %p35, %p36
      %p38 = scmp.ne.s32.totalorder %s27, %s30
      %p39 = scmp.eq.s32.totalorder %s22, 1
      %p40 = por %p38, %p39
      %p41 = scmp.ne.s32.totalorder %s30, %s31
      %p42 = scmp.eq.s32.totalorder %s22, 0
      %p43 = por %p41, %p42
      %p44 = scmp.ne.s32.totalorder %s30, %s31
      %p45 = scmp.eq.s32.totalorder %s23, 1
      %p46 = por %p44, %p45
      %p48 = scmp.ne.s32.totalorder %s31, %s47
      %p49 = scmp.eq.s32.totalorder %s23, 0
      %p50 = por %p48, %p49
      %s52 = sadd.s32 %s51, 1
      %p55 = scmp.eq.s32.totalorder %s17, 1
      %p56 = scmp.ne.s32.totalorder %s51, %s53
      %p57 = scmp.eq.s32.totalorder %s17, 0
      %p58 = por %p56, %p57
      %p59 = scmp.ne.s32.totalorder %s51, %s53
      %p60 = scmp.eq.s32.totalorder %s22, 1
      %p61 = por %p59, %p60
      %p62 = scmp.ne.s32.totalorder %s53, %s54
      %p63 = scmp.eq.s32.totalorder %s22, 0
      %p64 = por %p62, %p63
      %p65 = scmp.ne.s32.totalorder %s53, %s54
      %p66 = scmp.eq.s32.totalorder %s23, 1
      %p67 = por %p65, %p66
      %p69 = scmp.ne.s32.totalorder %s54, %s68
      %p70 = scmp.eq.s32.totalorder %s23, 0
      %p71 = por %p69, %p70
      %s73 = sadd.s32 %s72, 1
      %p76 = scmp.eq.s32.totalorder %s17, 1
      %p77 = scmp.ne.s32.totalorder %s72, %s74
      %p78 = scmp.eq.s32.totalorder %s17, 0
      %p79 = por %p77, %p78
      %p80 = scmp.ne.s32.totalorder %s72, %s74
      %p81 = scmp.eq.s32.totalorder %s22, 1
      %p82 = por %p80, %p81
      %p83 = scmp.ne.s32.totalorder %s74, %s75
      %p84 = scmp.eq.s32.totalorder %s22, 0
      %p85 = por %p83, %p84
      %p86 = scmp.ne.s32.totalorder %s74, %s75
      %p87 = scmp.eq.s32.totalorder %s23, 1
      %p88 = por %p86, %p87
      %p90 = scmp.ne.s32.totalorder %s75, %s89
      %p91 = scmp.eq.s32.totalorder %s23, 0
      %p92 = por %p90, %p91
      %s93 = ssub.s32 %s17, %s24
      %p94 = scmp.eq.s32.totalorder %s93, 0
      %s96 = sadd.s32 %s95, 1
      %s97 = scalar_select %p94, %s95, %s96
      %p100 = pneg %p94
      %p101 = scmp.eq.s32.totalorder %s17, 1
      %p102 = por %p100, %p101
      %p103 = scmp.ne.s32.totalorder %s95, %s98
      %p104 = scmp.eq.s32.totalorder %s17, 0
      %p105 = por %p103, %p104
      %p106 = scmp.ne.s32.totalorder %s95, %s98
      %p107 = scmp.eq.s32.totalorder %s22, 1
      %p108 = por %p106, %p107
      %p109 = scmp.ne.s32.totalorder %s98, %s99
      %p110 = scmp.eq.s32.totalorder %s22, 0
      %p111 = por %p109, %p110
      %p112 = scmp.ne.s32.totalorder %s98, %s99
      %p113 = scmp.eq.s32.totalorder %s23, 1
      %p114 = por %p112, %p113
      %p116 = scmp.ne.s32.totalorder %s99, %s115
      %p117 = scmp.eq.s32.totalorder %s23, 0
      %p118 = por %p116, %p117
      %s119 = ssub.s32 %s17, %s24
      %p120 = scmp.eq.s32.totalorder %s119, 0
      %s122 = sadd.s32 %s121, 1
      %s123 = scalar_select %p120, %s121, %s122
      %p126 = pneg %p120
      %p127 = scmp.eq.s32.totalorder %s17, 1
      %p128 = por %p126, %p127
      %p129 = scmp.ne.s32.totalorder %s121, %s124
      %p130 = scmp.eq.s32.totalorder %s17, 0
      %p131 = por %p129, %p130
      %p132 = scmp.ne.s32.totalorder %s121, %s124
      %p133 = scmp.eq.s32.totalorder %s22, 1
      %p134 = por %p132, %p133
      %p135 = scmp.ne.s32.totalorder %s124, %s125
      %p136 = scmp.eq.s32.totalorder %s22, 0
      %p137 = por %p135, %p136
      %p138 = scmp.ne.s32.totalorder %s124, %s125
      %p139 = scmp.eq.s32.totalorder %s23, 1
      %p140 = por %p138, %p139
      %p142 = scmp.ne.s32.totalorder %s125, %s141
      %p143 = scmp.eq.s32.totalorder %s23, 0
      %p144 = por %p142, %p143
      %p145 = scmp.le.s32.totalorder 1, %s17
      %p146 = scmp.lt.s32.totalorder %s17, 3
      %p147 = pnand %p145, %p146
      %p148 = pneg %p147
      // Predicated region
      $region9: #{tpu_custom_call.1} parent=5 // pred_check
        _
      $region10: #{tpu_custom_call.1} parent=5 // pred_check_branch
        %150 = sbr.rel (%p147) target = $region12
      $region11: #{tpu_custom_call.1} parent=5 // pred_region
        %s151 = ssub.s32 %s17, 1
        // Predicated region
        $region13: #{tpu_custom_call.1} parent=11 // pred_check
          %p152 = pneg %p64
        $region14: #{tpu_custom_call.1} parent=11 // pred_check_branch
          %154 = sbr.rel (%p152) target = $region16
        $region15: #{tpu_custom_call.1} parent=11 // pred_region
          %s156 = ssub.s32 2048, 2048
          %157 = vsyncadd [#allocation6], %s156
          %s158 = sshll.u32 [#allocation5], 4
          %s159 = int_to_ptr.vmem [resolvable:$true] %s158
          %164 = dma.hbm_to_vmem [thread:$0]  %s1, 2048, %s159, [#allocation6], 128, 128, 8
        $region16: #{tpu_custom_call.1} parent=11 // pred_fallthru
          _
        // Predicated region
        $region17: #{tpu_custom_call.1} parent=11 // pred_check
          %p165 = pneg %p85
        $region18: #{tpu_custom_call.1} parent=11 // pred_check_branch
          %167 = sbr.rel (%p165) target = $region20
        $region19: #{tpu_custom_call.1} parent=11 // pred_region
          _
        $region20: #{tpu_custom_call.1} parent=11 // pred_fallthru
          _
      $region12: #{tpu_custom_call.1} parent=5 // pred_fallthru
        _
      %p168 = scmp.lt.s32.totalorder %s17, 2
      // Predicated region
      $region21: #{tpu_custom_call.1} parent=5 // pred_check
        %p169 = pneg %p168
      $region22: #{tpu_custom_call.1} parent=5 // pred_check_branch
        %171 = sbr.rel (%p169) target = $region24
      $region23: #{tpu_custom_call.1} parent=5 // pred_region
        // Predicated region
        $region25: #{tpu_custom_call.1} parent=23 // pred_check
          %p172 = pneg %p37
        $region26: #{tpu_custom_call.1} parent=23 // pred_check_branch
          %174 = sbr.rel (%p172) target = $region28
        $region27: #{tpu_custom_call.1} parent=23 // pred_region
          %s175 = sand.u32 %s17, 1
          %s176 = scalar_lea.sflag [#allocation3], %s175
          %s177 = sand.u32 %s27, 1
          %s178 = smul.addr %s177, 8
          %s179 = scalar_lea.vmem [#allocation2], %s178
          %s181 = ssub.s32 128, 128
          %182 = vsyncadd %s176, %s181
          %s183 = smul.addr %s17, 128
          %s184 = scalar_lea.hbm %s0, %s183
          %s186 = sshll.u32 %s179, 4
          %s187 = int_to_ptr.vmem [resolvable:$true] %s186
          %189 = dma.hbm_to_vmem [thread:$0]  %s184, 128, %s187, %s176
        $region28: #{tpu_custom_call.1} parent=23 // pred_fallthru
          _
        // Predicated region
        $region29: #{tpu_custom_call.1} parent=23 // pred_check
          %p190 = pneg %p105
        $region30: #{tpu_custom_call.1} parent=23 // pred_check_branch
          %192 = sbr.rel (%p190) target = $region32
        $region31: #{tpu_custom_call.1} parent=23 // pred_region
          %s193 = sand.u32 %s17, 1
          %s194 = scalar_lea.sflag [#allocation3], %s193
          %s195 = sand.u32 %s95, 1
          %s196 = smul.addr %s195, 8
          %s197 = scalar_lea.vmem [#allocation7], %s196
          %s199 = ssub.s32 128, 128
          %200 = vsyncadd %s194, %s199
          %s201 = smul.addr %s17, 128
          %s202 = scalar_lea.hbm %s3, %s201
          %s204 = sshll.u32 %s197, 4
          %s205 = int_to_ptr.vmem [resolvable:$true] %s204
          %207 = dma.hbm_to_vmem [thread:$0]  %s202, 128, %s205, %s194
        $region32: #{tpu_custom_call.1} parent=23 // pred_fallthru
          _
      $region24: #{tpu_custom_call.1} parent=5 // pred_fallthru
        _
      %p208 = scmp.le.s32.totalorder 1, %s17
      %p209 = scmp.lt.s32.totalorder %s17, 3
      %p210 = pnand %p208, %p209
      %p211 = pneg %p210
      // Predicated region
      $region33: #{tpu_custom_call.1} parent=5 // pred_check
        _
      $region34: #{tpu_custom_call.1} parent=5 // pred_check_branch
        %213 = sbr.rel (%p210) target = $region36
      $region35: #{tpu_custom_call.1} parent=5 // pred_region
        %s214 = ssub.s32 %s17, 1
        %s215 = sand.u32 %s22, 1
        %s216 = scalar_lea.sflag [#allocation3], %s215
        %s217 = sand.u32 %s30, 1
        %s218 = smul.addr %s217, 8
        %s219 = scalar_lea.vmem [#allocation2], %s218
        // Predicated region
        $region37: #{tpu_custom_call.1} parent=35 // pred_check
          %p220 = pneg %p43
        $region38: #{tpu_custom_call.1} parent=35 // pred_check_branch
          %222 = sbr.rel (%p220) target = $region40
        $region39: #{tpu_custom_call.1} parent=35 // pred_region
          %223 = dma.done %s216, 128
        $region40: #{tpu_custom_call.1} parent=35 // pred_fallthru
          _
        // Predicated region
        $region41: #{tpu_custom_call.1} parent=35 // pred_check
          %p224 = pneg %p64
        $region42: #{tpu_custom_call.1} parent=35 // pred_check_branch
          %226 = sbr.rel (%p224) target = $region44
        $region43: #{tpu_custom_call.1} parent=35 // pred_region
          %227 = dma.done [#allocation6], 2048
        $region44: #{tpu_custom_call.1} parent=35 // pred_fallthru
          _
        %s228 = sand.u32 %s22, 1
        %s229 = scalar_lea.sflag [#allocation3], %s228
        %s230 = sand.u32 %s98, 1
        %s231 = smul.addr %s230, 8
        %s232 = scalar_lea.vmem [#allocation7], %s231
        // Predicated region
        $region45: #{tpu_custom_call.1} parent=35 // pred_check
          %p233 = pneg %p111
        $region46: #{tpu_custom_call.1} parent=35 // pred_check_branch
          %235 = sbr.rel (%p233) target = $region48
        $region47: #{tpu_custom_call.1} parent=35 // pred_region
          %236 = dma.done %s229, 128
        $region48: #{tpu_custom_call.1} parent=35 // pred_fallthru
          _
        %s237 = sand.u32 %s22, 1
        %s238 = scalar_lea.sflag [#allocation3], %s237
        %s239 = sand.u32 %s30, 1
        %s240 = smul.addr %s239, 8
        %s241 = scalar_lea.vmem [#allocation2], %s240
        %p242 = pneg %p43
        %p243 = pneg %p40
        %p244 = pneg %p64
        %p245 = pneg %p61
        %p246 = pneg %p85
        %p247 = pneg %p82
        %s248 = sand.u32 %s22, 1
        %s249 = scalar_lea.sflag [#allocation3], %s248
        %s250 = sand.u32 %s98, 1
        %s251 = smul.addr %s250, 8
        %s252 = scalar_lea.vmem [#allocation7], %s251
        %p253 = pneg %p111
        %p254 = pneg %p108
        %p255 = pneg %p137
        %p256 = pneg %p134
        %s257 = sand.u32 %s124, 1
        %s258 = scalar_lea.sflag [#allocation4], %s257
        %s259 = sand.u32 %s124, 1
        %s260 = smul.addr %s259, 8
        %s261 = scalar_lea.vmem [#allocation8], %s260
        %v262 = vld [vmem:[%s219] sm:$0xff]
        %v263 = vld [vmem:[#allocation5] sm:$0xff]
        %v264 = vld [vmem:[#allocation5 + $0x8] sm:$0xff]
        %v265 = vld [vmem:[#allocation5 + $0x10] sm:$0xff]
        %v266 = vld [vmem:[#allocation5 + $0x18] sm:$0xff]
        %v267 = vld [vmem:[#allocation5 + $0x20] sm:$0xff]
        %v268 = vld [vmem:[#allocation5 + $0x28] sm:$0xff]
        %v269 = vld [vmem:[#allocation5 + $0x30] sm:$0xff]
        %v270 = vld [vmem:[#allocation5 + $0x38] sm:$0xff]
        %v271 = vld [vmem:[#allocation5 + $0x40] sm:$0xff]
        %v272 = vld [vmem:[#allocation5 + $0x48] sm:$0xff]
        %v273 = vld [vmem:[#allocation5 + $0x50] sm:$0xff]
        %v274 = vld [vmem:[#allocation5 + $0x58] sm:$0xff]
        %v275 = vld [vmem:[#allocation5 + $0x60] sm:$0xff]
        %v276 = vld [vmem:[#allocation5 + $0x68] sm:$0xff]
        %v277 = vld [vmem:[#allocation5 + $0x70] sm:$0xff]
        %v278 = vld [vmem:[#allocation5 + $0x78] sm:$0xff]
        %v279 = vld [vmem:[%s2] sm:$0x7]
        %v280 = vlaneseq
        %v281 = vshrl.u32 %v280, 7
        %v282 = vsub.s32 0, %v281
        %v283 = vrot.slane %v279, %v282
        %284 = vmatprep.subr.mxu0 0.0
        %285 = vmatpush1.msra.mxu0 %v263
        %286 = vmatprep.subr.mxu0 0.0
        %287 = vmatpush1.msra.mxu0 %v264
        %288 = vmatprep.subr.mxu0 0.0
        %289 = vmatpush1.msra.mxu0 %v265
        %290 = vmatprep.subr.mxu0 0.0
        %291 = vmatpush1.msra.mxu0 %v266
        %292 = vmatprep.subr.mxu0 0.0
        %293 = vmatpush1.msra.mxu0 %v267
        %294 = vmatprep.subr.mxu0 0.0
        %295 = vmatpush1.msra.mxu0 %v268
        %296 = vmatprep.subr.mxu0 0.0
        %297 = vmatpush1.msra.mxu0 %v269
        %298 = vmatprep.subr.mxu0 0.0
        %299 = vmatpush1.msra.mxu0 %v270
        %300 = vmatprep.subr.mxu0 0.0
        %301 = vmatpush1.msra.mxu0 %v271
        %302 = vmatprep.subr.mxu0 0.0
        %303 = vmatpush1.msra.mxu0 %v272
        %304 = vmatprep.subr.mxu0 0.0
        %305 = vmatpush1.msra.mxu0 %v273
        %306 = vmatprep.subr.mxu0 0.0
        %307 = vmatpush1.msra.mxu0 %v274
        %308 = vmatprep.subr.mxu0 0.0
        %309 = vmatpush1.msra.mxu0 %v275
        %310 = vmatprep.subr.mxu0 0.0
        %311 = vmatpush1.msra.mxu0 %v276
        %312 = vmatprep.subr.mxu0 0.0
        %313 = vmatpush1.msra.mxu0 %v277
        %314 = vmatprep.subr.mxu0 0.0
        %315 = vmatpush1.msra.mxu0 %v278
        %316 = vmatprep.subr.mxu0 0.0
        %317 = vmatpush1.msra.mxu0 0.0
        %318 = vmatprep.subr.mxu0 0.0
        %319 = vmatpush1.msra.mxu0 0.0
        %320 = vmatprep.subr.mxu0 0.0
        %321 = vmatpush1.msra.mxu0 0.0
        %322 = vmatprep.subr.mxu0 0.0
        %323 = vmatpush1.msra.mxu0 0.0
        %324 = vmatprep.subr.mxu0 0.0
        %325 = vmatpush1.msra.mxu0 0.0
        %326 = vmatprep.subr.mxu0 0.0
        %327 = vmatpush1.msra.mxu0 0.0
        %328 = vmatprep.subr.mxu0 0.0
        %329 = vmatpush1.msra.mxu0 0.0
        %330 = vmatprep.subr.mxu0 0.0
        %331 = vmatpush1.msra.mxu0 0.0
        %332 = vmatprep.subr.mxu0 0.0
        %333 = vmatpush1.msra.mxu0 0.0
        %334 = vmatprep.subr.mxu0 0.0
        %335 = vmatpush1.msra.mxu0 0.0
        %336 = vmatprep.subr.mxu0 0.0
        %337 = vmatpush1.msra.mxu0 0.0
        %338 = vmatprep.subr.mxu0 0.0
        %339 = vmatpush1.msra.mxu0 0.0
        %340 = vmatprep.subr.mxu0 0.0
        %341 = vmatpush1.msra.mxu0 0.0
        %342 = vmatprep.subr.mxu0 0.0
        %343 = vmatpush1.msra.mxu0 0.0
        %344 = vmatprep.subr.mxu0 0.0
        %345 = vmatpush1.msra.mxu0 0.0
        %346 = vmatprep.subr.mxu0 0.0
        %347 = vmatpush1.msra.mxu0 0.0
        %348 = vmatprep.mubr.f32.mxu0 0.0
        %349 = vmatmul.mubr.f32.gmra.mrb[0].mxu0 %v262
        %v350 = vpop.f32.mrb[0].mxu0
        %v351 = vadd.f32 %v283, %v350
        %v352 = vpop.f32.mrb[0].mxu0
        %353 = vdwg.mxu0
        %v354 = vld [vmem:[%s232] sm:$0xff]
        %v355 = vadd.f32 %v351, %v354
        %356 = vadd.xlane.f32.xlu0 %v355
        %v357 = vpop.xlane.xlu0 %356
        %v358 = vmul.f32 %v357, 0.03125
        %v359 = vsub.f32 %v355, %v358
        %v360 = vlaneseq
        %v361 = vand.u32 %v360, 127
        %vm362 = vcmp.lt.s32.totalorder %v361, 32
        %v363 = vsel %vm362, %v359, 0.0
        %v364 = vmul.f32 %v363, %v363
        %365 = vadd.xlane.f32.xlu0 %v364
        %v366 = vpop.xlane.xlu0 %365
        %v367 = vmul.f32 %v366, 0.03125
        %v368 = vadd.f32 %v367, 1e-12
        %v369 = vrsqrt.pop %v368
        %v370 = vmul.f32 %v363, %v369
        %v371 = vlaneseq
        %v372 = vshrl.u32 %v371, 7
        %v373 = vsub.s32 1, %v372
        %v374 = vrot.slane %v279, %v373
        %v375 = vmul.f32 %v370, %v374
        %v376 = vlaneseq
        %v377 = vshrl.u32 %v376, 7
        %v378 = vsub.s32 2, %v377
        %v379 = vrot.slane %v279, %v378
        %v380 = vadd.f32 %v375, %v379
        %381 = vst [vmem:[%s261] sm:$0xff] %v380
        %s382 = sand.u32 %s124, 1
        %s383 = scalar_lea.sflag [#allocation4], %s382
        %s384 = sand.u32 %s124, 1
        %s385 = smul.addr %s384, 8
        %s386 = scalar_lea.vmem [#allocation8], %s385
        // Predicated region
        $region49: #{tpu_custom_call.1} parent=35 // pred_check
          %p387 = pneg %p134
        $region50: #{tpu_custom_call.1} parent=35 // pred_check_branch
          %389 = sbr.rel (%p387) target = $region52
        $region51: #{tpu_custom_call.1} parent=35 // pred_region
          %s391 = ssub.s32 128, 128
          %392 = vsyncadd %s383, %s391
          %s393 = smul.addr %s22, 128
          %s394 = scalar_lea.hbm %s4, %s393
          %s396 = sshll.u32 %s386, 4
          %s397 = int_to_ptr.vmem [resolvable:$true] %s396
          %399 = dma.vmem_to_hbm [thread:$0]  %s397, 128, %s394, %s383
        $region52: #{tpu_custom_call.1} parent=35 // pred_fallthru
          _
      $region36: #{tpu_custom_call.1} parent=5 // pred_fallthru
        _
      %p400 = scmp.le.s32.totalorder 2, %s17
      // Predicated region
      $region53: #{tpu_custom_call.1} parent=5 // pred_check
        %p401 = pneg %p400
      $region54: #{tpu_custom_call.1} parent=5 // pred_check_branch
        %403 = sbr.rel (%p401) target = $region56
      $region55: #{tpu_custom_call.1} parent=5 // pred_region
        %s404 = ssub.s32 %s17, 2
        // Predicated region
        $region57: #{tpu_custom_call.1} parent=55 // pred_check
          %p405 = pneg %p140
        $region58: #{tpu_custom_call.1} parent=55 // pred_check_branch
          %407 = sbr.rel (%p405) target = $region60
        $region59: #{tpu_custom_call.1} parent=55 // pred_region
          %s408 = sand.u32 %s125, 1
          %s409 = scalar_lea.sflag [#allocation4], %s408
          %s410 = sand.u32 %s125, 1
          %s411 = smul.addr %s410, 8
          %s412 = scalar_lea.vmem [#allocation8], %s411
          %413 = dma.done %s409, 128
        $region60: #{tpu_custom_call.1} parent=55 // pred_fallthru
          _
      $region56: #{tpu_custom_call.1} parent=5 // pred_fallthru
        _
    $region6: #{tpu_custom_call.1} parent=1 // loop_footer
      %s21 = sadd.s32 1, %s17
    $region7: #{tpu_custom_call.1} parent=1 // loop_footer_branch
      %16 = sbr.rel target = $region3
    $region8: #{tpu_custom_call.1} parent=1 // loop_exit
      _
    %414 = vsyncpa [#allocation3], 1
    %s415 = scalar_lea.sflag [#allocation3], 1
    %416 = vsyncpa %s415, 1
    %417 = vsyncpa [#allocation6], 1
    %418 = vsyncpa [#allocation4], 1
    %s419 = scalar_lea.sflag [#allocation4], 1
    %420 = vsyncpa %s419, 1

</llo_original>
